<compile_context>
chip_gen: v5e
topology: v5e:2x2
jax: 0.10.0
libtpu: 0.0.40
codegen_flags: <defaults>
</compile_context>

<pallas_src>
import functools

import jax
import jax.numpy as jnp
from jax.experimental import pallas as pl
from jax.experimental.pallas import tpu as pltpu

LANE = 128
SUBLANE = 8


def _round_up(n, m):
    return ((n + m - 1) // m) * m


def qnetwork_kernel(x_ref, w1_ref, b1_ref, w2_ref, b2_ref, w3_ref, b3_ref, o_ref):
    """Fused fc1->ReLU->fc2->ReLU->fc3, feature-major (batch on lanes).

    Shapes (per grid step):
      x_ref : (S_pad, TB)      w1_ref: (H_pad, S_pad)   b1_ref: (H_pad, 1)
      w2_ref: (H_pad, H_pad)   b2_ref: (H_pad, 1)
      w3_ref: (A_pad, H_pad)   b3_ref: (A_pad, 1)
      o_ref : (A_pad, TB)      all f32
    """
    x = x_ref[...]                                                      # (S_pad, TB)
    h = jnp.dot(w1_ref[...], x, preferred_element_type=jnp.float32)    # (H_pad, TB)
    h = jnp.maximum(h + b1_ref[...], 0.0)
    h = jnp.dot(w2_ref[...], h, preferred_element_type=jnp.float32)    # (H_pad, TB)
    h = jnp.maximum(h + b2_ref[...], 0.0)
    out = jnp.dot(w3_ref[...], h, preferred_element_type=jnp.float32)  # (A_pad, TB)
    o_ref[...] = (out + b3_ref[...]).astype(o_ref.dtype)               # lane-dense store


def prepare_params(params):
    """One-time padding of nn.Linear-layout params (hoisted out of the hot path).

    Input : w* of shape (out_features, in_features), b* of shape (out_features,).
    Output: f32 dict with w1 (H_pad, S_pad), w2 (H_pad, H_pad), w3 (A_pad, H_pad),
            biases (out_pad, 1).  Zero padding is semantics-preserving: padded x
            rows hit zero weight columns, padded hidden rows stay 0 through
            ReLU(0+0) and hit zero columns of the next weight, padded output
            rows are sliced off in the wrapper.
    """
    hidden, state = params["w1"].shape
    action = params["w3"].shape[0]
    s_pad = _round_up(state, SUBLANE)    # contraction dim of fc1 (keep minimal)
    h_pad = _round_up(hidden, LANE)      # hidden width -> MXU-native 128
    a_pad = _round_up(action, SUBLANE)   # output sublanes (8, not 128!)

    def pad_w(w, rows, cols):
        w = jnp.asarray(w, jnp.float32)
        return jnp.pad(w, ((0, rows - w.shape[0]), (0, cols - w.shape[1])))

    def pad_b(b, rows):
        b = jnp.asarray(b, jnp.float32).reshape(-1, 1)
        return jnp.pad(b, ((0, rows - b.shape[0]), (0, 0)))

    return {
        "w1": pad_w(params["w1"], h_pad, s_pad), "b1": pad_b(params["b1"], h_pad),
        "w2": pad_w(params["w2"], h_pad, h_pad), "b2": pad_b(params["b2"], h_pad),
        "w3": pad_w(params["w3"], a_pad, h_pad), "b3": pad_b(params["b3"], a_pad),
    }


def _forward_impl(x, padded, *, action_space):
    B, S = x.shape
    w1, b1 = padded["w1"], padded["b1"]
    w2, b2 = padded["w2"], padded["b2"]
    w3, b3 = padded["w3"], padded["b3"]
    h_pad, s_pad = w1.shape
    a_pad = w3.shape[0]

    # Batch tiling on the lane axis: TB must be a multiple of 128.  Aim for
    # >= 4 grid steps (v7x dual-TC sharding + per-core pipelining) while
    # capping TB at 2048 to amortize per-step overhead; never below 128.
    b_min = _round_up(B, LANE)
    TB = max(LANE, min(2048, _round_up((b_min + 3) // 4, LANE)))
    B_pad = _round_up(B, TB)
    n_tiles = B_pad // TB

    # Single tiny fused pad+transpose per call (x is only B*S floats); all
    # weight padding already happened in prepare_params.
    xt = jnp.pad(jnp.transpose(x).astype(jnp.float32),
                 ((0, s_pad - S), (0, B_pad - B)))                     # (S_pad, B_pad)

    # Constant index_map -> fetched once, VMEM-resident across all batch tiles.
    resident = lambda a: pl.BlockSpec(a.shape, lambda i: (0, 0))

    out_t = pl.pallas_call(
        qnetwork_kernel,
        out_shape=jax.ShapeDtypeStruct((a_pad, B_pad), jnp.float32),
        grid=(n_tiles,),
        in_specs=[
            pl.BlockSpec((s_pad, TB), lambda i: (0, i)),   # x tile, lane-dense
            resident(w1), resident(b1),
            resident(w2), resident(b2),
            resident(w3), resident(b3),
        ],
        # Lane-dense output: 8 sublanes x TB (mult of 128) lanes; HBM writeback
        # is ~4x the real payload instead of the previous 64x.
        out_specs=pl.BlockSpec((a_pad, TB), lambda i: (0, i)),
        compiler_params=pltpu.CompilerParams(
            dimension_semantics=("parallel",),      # shards tiles across TCs on v7x
            vmem_limit_bytes=32 * 1024 * 1024,      # budget incl. h1/h2 scratch, see header
        ),
    )(xt, w1, b1, w2, b2, w3, b3)

    # (A_pad, B_pad) -> (B, action_space); tiny slice+transpose, fused under jit.
    return jnp.transpose(out_t[:action_space, :B])


# Jit the whole forward so the pad/transpose/slice wrapper ops fuse and the
# launch path stays short (review item: don't pay separate XLA ops per call).
qnetwork_forward = jax.jit(_forward_impl, static_argnames=("action_space",))


def init_params(key, state_space, action_space, hidden_size=24):
    """nn.Linear-style init: weight (out, in), bias (out,), U(-1/sqrt(fan_in), +)."""
    ks = jax.random.split(key, 6)

    def linear(kw, kb, fan_in, fan_out):
        bound = 1.0 / jnp.sqrt(jnp.float32(fan_in))
        w = jax.random.uniform(kw, (fan_out, fan_in), jnp.float32, -bound, bound)
        b = jax.random.uniform(kb, (fan_out,), jnp.float32, -bound, bound)
        return w, b

    w1, b1 = linear(ks[0], ks[1], state_space, hidden_size)
    w2, b2 = linear(ks[2], ks[3], hidden_size, hidden_size)
    w3, b3 = linear(ks[4], ks[5], hidden_size, action_space)
    return {"w1": w1, "b1": b1, "w2": w2, "b2": b2, "w3": w3, "b3": b3}


def qnetwork_ref(x, p):
    h1 = jnp.maximum(x @ p["w1"].T + p["b1"], 0.0)
    h2 = jnp.maximum(h1 @ p["w2"].T + p["b2"], 0.0)
    return h2 @ p["w3"].T + p["b3"]


if __name__ == "__main__":
    key = jax.random.PRNGKey(0)
    k_x, k_x2, k_p = jax.random.split(key, 3)

    state_space = 4      # CartPole-like observation dim
    action_space = 2
    hidden_size = 24     # module default
    params = init_params(k_p, state_space, action_space, hidden_size)
    padded = prepare_params(params)   # one-time padding, outside the hot path

    # Small, single-tile case (action selection).
    batch = 8
    x = jax.random.normal(k_x, (batch, state_space), jnp.float32)
    out = jax.block_until_ready(qnetwork_forward(x, padded, action_space=action_space))
    ref = qnetwork_ref(x, params)
    assert out.shape == (batch, action_space)
    assert jnp.allclose(out, ref, atol=1e-4, rtol=1e-4), "mismatch vs pure-JAX reference (small)"

    # Replay-style batch: exercises 4 batch tiles (TB=256) + batch padding slice.
    batch2 = 1000
    x2 = jax.random.normal(k_x2, (batch2, state_space), jnp.float32)
    out2 = jax.block_until_ready(qnetwork_forward(x2, padded, action_space=action_space))
    ref2 = qnetwork_ref(x2, params)
    assert out2.shape == (batch2, action_space)
    assert jnp.allclose(out2, ref2, atol=1e-4, rtol=1e-4), "mismatch vs pure-JAX reference (large)"

    print("KERNEL_OK")
</pallas_src>

<mosaic_0001>
module attributes {stable_mosaic.version = 11 : i64} {
  func.func @qnetwork_kernel(%arg0: i32, %arg1: memref<8x128xf32, #tpu.memory_space<vmem>>, %arg2: memref<128x8xf32, #tpu.memory_space<vmem>>, %arg3: memref<128x1xf32, #tpu.memory_space<vmem>>, %arg4: memref<128x128xf32, #tpu.memory_space<vmem>>, %arg5: memref<128x1xf32, #tpu.memory_space<vmem>>, %arg6: memref<8x128xf32, #tpu.memory_space<vmem>>, %arg7: memref<8x1xf32, #tpu.memory_space<vmem>>, %arg8: memref<8x128xf32, #tpu.memory_space<vmem>>) attributes {dimension_semantics = [#tpu.dimension_semantics<parallel>], iteration_bounds = array<i64: 1>, scalar_prefetch = 0 : i64, scratch_operands = 0 : i64, tpu.core_type = #tpu.core_type<tc>, window_params = [{transform_indices = @transform_0, window_bounds = array<i64: 8, 128>}, {pipeline_mode = #tpu.pipeline_mode<synchronous>, transform_indices = @transform_1, window_bounds = array<i64: 128, 8>}, {pipeline_mode = #tpu.pipeline_mode<synchronous>, transform_indices = @transform_2, window_bounds = array<i64: 128, 1>}, {pipeline_mode = #tpu.pipeline_mode<synchronous>, transform_indices = @transform_3, window_bounds = array<i64: 128, 128>}, {pipeline_mode = #tpu.pipeline_mode<synchronous>, transform_indices = @transform_4, window_bounds = array<i64: 128, 1>}, {pipeline_mode = #tpu.pipeline_mode<synchronous>, transform_indices = @transform_5, window_bounds = array<i64: 8, 128>}, {pipeline_mode = #tpu.pipeline_mode<synchronous>, transform_indices = @transform_6, window_bounds = array<i64: 8, 1>}, {transform_indices = @transform_7, window_bounds = array<i64: 8, 128>}]} {
    %c0 = arith.constant 0 : index
    %c0_0 = arith.constant 0 : index
    %0 = vector.load %arg1[%c0, %c0_0] : memref<8x128xf32, #tpu.memory_space<vmem>>, vector<8x128xf32>
    %c0_1 = arith.constant 0 : index
    %c0_2 = arith.constant 0 : index
    %1 = vector.load %arg2[%c0_1, %c0_2] : memref<128x8xf32, #tpu.memory_space<vmem>>, vector<128x8xf32>
    %cst = arith.constant dense<0.000000e+00> : vector<128x128xf32>
    %2 = tpu.matmul %1, %0, %cst {dimension_numbers = #tpu.dot_dimension_numbers<[1], [0], [0], [1], [0, 0, 1, 1], [], []>} : vector<128x8xf32>, vector<8x128xf32>, vector<128x128xf32> -> vector<128x128xf32>
    %c0_3 = arith.constant 0 : index
    %c0_4 = arith.constant 0 : index
    %3 = vector.load %arg3[%c0_3, %c0_4] : memref<128x1xf32, #tpu.memory_space<vmem>>, vector<128x1xf32>
    %4 = vector.broadcast %3 : vector<128x1xf32> to vector<128x128xf32>
    %5 = arith.addf %2, %4 : vector<128x128xf32>
    %cst_5 = arith.constant 0.000000e+00 : f32
    %6 = vector.broadcast %cst_5 : f32 to vector<128x128xf32>
    %7 = arith.maximumf %5, %6 : vector<128x128xf32>
    %c0_6 = arith.constant 0 : index
    %c0_7 = arith.constant 0 : index
    %8 = vector.load %arg4[%c0_6, %c0_7] : memref<128x128xf32, #tpu.memory_space<vmem>>, vector<128x128xf32>
    %cst_8 = arith.constant dense<0.000000e+00> : vector<128x128xf32>
    %9 = tpu.matmul %8, %7, %cst_8 {dimension_numbers = #tpu.dot_dimension_numbers<[1], [0], [0], [1], [0, 0, 1, 1], [], []>} : vector<128x128xf32>, vector<128x128xf32>, vector<128x128xf32> -> vector<128x128xf32>
    %c0_9 = arith.constant 0 : index
    %c0_10 = arith.constant 0 : index
    %10 = vector.load %arg5[%c0_9, %c0_10] : memref<128x1xf32, #tpu.memory_space<vmem>>, vector<128x1xf32>
    %11 = vector.broadcast %10 : vector<128x1xf32> to vector<128x128xf32>
    %12 = arith.addf %9, %11 : vector<128x128xf32>
    %cst_11 = arith.constant 0.000000e+00 : f32
    %13 = vector.broadcast %cst_11 : f32 to vector<128x128xf32>
    %14 = arith.maximumf %12, %13 : vector<128x128xf32>
    %c0_12 = arith.constant 0 : index
    %c0_13 = arith.constant 0 : index
    %15 = vector.load %arg6[%c0_12, %c0_13] : memref<8x128xf32, #tpu.memory_space<vmem>>, vector<8x128xf32>
    %cst_14 = arith.constant dense<0.000000e+00> : vector<8x128xf32>
    %16 = tpu.matmul %15, %14, %cst_14 {dimension_numbers = #tpu.dot_dimension_numbers<[1], [0], [0], [1], [0, 0, 1, 1], [], []>} : vector<8x128xf32>, vector<128x128xf32>, vector<8x128xf32> -> vector<8x128xf32>
    %c0_15 = arith.constant 0 : index
    %c0_16 = arith.constant 0 : index
    %17 = vector.load %arg7[%c0_15, %c0_16] : memref<8x1xf32, #tpu.memory_space<vmem>>, vector<8x1xf32>
    %18 = vector.broadcast %17 : vector<8x1xf32> to vector<8x128xf32>
    %19 = arith.addf %16, %18 : vector<8x128xf32>
    %c0_17 = arith.constant 0 : index
    %c0_18 = arith.constant 0 : index
    %20 = vector.load %arg8[%c0_17, %c0_18] : memref<8x128xf32, #tpu.memory_space<vmem>>, vector<8x128xf32>
    tpu.vector_store %arg8[%c0_17, %c0_18], %19 {strides = array<i32>} : memref<8x128xf32, #tpu.memory_space<vmem>>, vector<8x128xf32>,
    return
  }
  func.func @transform_0(%arg0: i32) -> (i32, i32) {
    %c0_i32 = arith.constant 0 : i32
    %c0_i32_0 = arith.constant 0 : i32
    return %c0_i32, %arg0 : i32, i32
  }
  func.func @transform_1(%arg0: i32) -> (i32, i32) {
    %c0_i32 = arith.constant 0 : i32
    %c0_i32_0 = arith.constant 0 : i32
    %c0_i32_1 = arith.constant 0 : i32
    return %c0_i32, %c0_i32_0 : i32, i32
  }
  func.func @transform_2(%arg0: i32) -> (i32, i32) {
    %c0_i32 = arith.constant 0 : i32
    %c0_i32_0 = arith.constant 0 : i32
    %c0_i32_1 = arith.constant 0 : i32
    return %c0_i32, %c0_i32_0 : i32, i32
  }
  func.func @transform_3(%arg0: i32) -> (i32, i32) {
    %c0_i32 = arith.constant 0 : i32
    %c0_i32_0 = arith.constant 0 : i32
    %c0_i32_1 = arith.constant 0 : i32
    return %c0_i32, %c0_i32_0 : i32, i32
  }
  func.func @transform_4(%arg0: i32) -> (i32, i32) {
    %c0_i32 = arith.constant 0 : i32
    %c0_i32_0 = arith.constant 0 : i32
    %c0_i32_1 = arith.constant 0 : i32
    return %c0_i32, %c0_i32_0 : i32, i32
  }
  func.func @transform_5(%arg0: i32) -> (i32, i32) {
    %c0_i32 = arith.constant 0 : i32
    %c0_i32_0 = arith.constant 0 : i32
    %c0_i32_1 = arith.constant 0 : i32
    return %c0_i32, %c0_i32_0 : i32, i32
  }
  func.func @transform_6(%arg0: i32) -> (i32, i32) {
    %c0_i32 = arith.constant 0 : i32
    %c0_i32_0 = arith.constant 0 : i32
    %c0_i32_1 = arith.constant 0 : i32
    return %c0_i32, %c0_i32_0 : i32, i32
  }
  func.func @transform_7(%arg0: i32) -> (i32, i32) {
    %c0_i32 = arith.constant 0 : i32
    %c0_i32_0 = arith.constant 0 : i32
    return %c0_i32, %arg0 : i32, i32
  }
}

</mosaic_0001>

<llo_original>
// kernel: _forward_impl.1
$region0: #{_forward_impl.1}
  #allocation0 [shape = 'u32[]', space=smem, size = 0x4, offset = 0x4, fixed_abs, tag = 'smem constant byte address 0x4 - core index']
  #allocation1 [shape = 'u32[72,128]{1,0:T(1,128)}', space=vmem, size = 0x9000, scoped, tag = 'internal scratch']
  %s0 = inlined_call_operand.vmem [shape: f32[8,128], index: 0, kind: input, shape index: {}]
  %s1 = inlined_call_operand.vmem [shape: f32[128,8], index: 1, kind: input, shape index: {}]
  %s2 = inlined_call_operand.vmem [shape: f32[128,1], index: 2, kind: input, shape index: {}]
  %s3 = inlined_call_operand.vmem [shape: f32[128,128], index: 3, kind: input, shape index: {}]
  %s4 = inlined_call_operand.vmem [shape: f32[128,1], index: 4, kind: input, shape index: {}]
  %s5 = inlined_call_operand.vmem [shape: f32[8,128], index: 5, kind: input, shape index: {}]
  %s6 = inlined_call_operand.vmem [shape: f32[8,1], index: 6, kind: input, shape index: {}]
  %s7 = inlined_call_operand.vmem [shape: f32[8,128], index: 7, kind: output, shape index: {}]
  %s8 = sld [smem:[#allocation0]]
  $region38: #{_forward_impl.1} parent=0
    _
  %s10 = ssub.s32 1, %s8
  %s11 = scalar_select 0, %s10, %s8
  // Predicated region
  $region2: #{_forward_impl.1} parent=0 // pred_check
    _
  $region3: #{_forward_impl.1} parent=0 // pred_check_branch
    %13 = sbr.rel (0) target = $region5
  $region4: #{_forward_impl.1} parent=0 // pred_region
    _
  $region5: #{_forward_impl.1} parent=0 // pred_fallthru
    _
  // Predicated region
  $region6: #{_forward_impl.1} parent=0 // pred_check
    _
  $region7: #{_forward_impl.1} parent=0 // pred_check_branch
    %15 = sbr.rel (0) target = $region9
  $region8: #{_forward_impl.1} parent=0 // pred_region
    _
  $region9: #{_forward_impl.1} parent=0 // pred_fallthru
    _
  // Predicated region
  $region10: #{_forward_impl.1} parent=0 // pred_check
    _
  $region11: #{_forward_impl.1} parent=0 // pred_check_branch
    %17 = sbr.rel (0) target = $region13
  $region12: #{_forward_impl.1} parent=0 // pred_region
    _
  $region13: #{_forward_impl.1} parent=0 // pred_fallthru
    _
  // Predicated region
  $region14: #{_forward_impl.1} parent=0 // pred_check
    _
  $region15: #{_forward_impl.1} parent=0 // pred_check_branch
    %19 = sbr.rel (0) target = $region17
  $region16: #{_forward_impl.1} parent=0 // pred_region
    _
  $region17: #{_forward_impl.1} parent=0 // pred_fallthru
    _
  // Predicated region
  $region18: #{_forward_impl.1} parent=0 // pred_check
    _
  $region19: #{_forward_impl.1} parent=0 // pred_check_branch
    %21 = sbr.rel (0) target = $region21
  $region20: #{_forward_impl.1} parent=0 // pred_region
    _
  $region21: #{_forward_impl.1} parent=0 // pred_fallthru
    _
  // Predicated region
  $region22: #{_forward_impl.1} parent=0 // pred_check
    _
  $region23: #{_forward_impl.1} parent=0 // pred_check_branch
    %23 = sbr.rel (0) target = $region25
  $region24: #{_forward_impl.1} parent=0 // pred_region
    _
  $region25: #{_forward_impl.1} parent=0 // pred_fallthru
    _
  // Predicated region
  $region26: #{_forward_impl.1} parent=0 // pred_check
    _
  $region27: #{_forward_impl.1} parent=0 // pred_check_branch
    %25 = sbr.rel (0) target = $region29
  $region28: #{_forward_impl.1} parent=0 // pred_region
    _
  $region29: #{_forward_impl.1} parent=0 // pred_fallthru
    _
  %v26 = vld [vmem:[%s0] sm:$0xff]
  %v27 = vld [vmem:[%s1] sm:$0xff]
  %v28 = vld [vmem:[%s1 + $0x8] sm:$0xff]
  %v29 = vld [vmem:[%s1 + $0x10] sm:$0xff]
  %v30 = vld [vmem:[%s1 + $0x18] sm:$0xff]
  %v31 = vld [vmem:[%s1 + $0x20] sm:$0xff]
  %v32 = vld [vmem:[%s1 + $0x28] sm:$0xff]
  %v33 = vld [vmem:[%s1 + $0x30] sm:$0xff]
  %v34 = vld [vmem:[%s1 + $0x38] sm:$0xff]
  %v35 = vld [vmem:[%s1 + $0x40] sm:$0xff]
  %v36 = vld [vmem:[%s1 + $0x48] sm:$0xff]
  %v37 = vld [vmem:[%s1 + $0x50] sm:$0xff]
  %v38 = vld [vmem:[%s1 + $0x58] sm:$0xff]
  %v39 = vld [vmem:[%s1 + $0x60] sm:$0xff]
  %v40 = vld [vmem:[%s1 + $0x68] sm:$0xff]
  %v41 = vld [vmem:[%s1 + $0x70] sm:$0xff]
  %v42 = vld [vmem:[%s1 + $0x78] sm:$0xff]
  %v43 = vld [vmem:[%s2] sm:$0xff]
  %v44 = vld [vmem:[%s2 + $0x8] sm:$0xff]
  %v45 = vld [vmem:[%s2 + $0x10] sm:$0xff]
  %v46 = vld [vmem:[%s2 + $0x18] sm:$0xff]
  %v47 = vld [vmem:[%s2 + $0x20] sm:$0xff]
  %v48 = vld [vmem:[%s2 + $0x28] sm:$0xff]
  %v49 = vld [vmem:[%s2 + $0x30] sm:$0xff]
  %v50 = vld [vmem:[%s2 + $0x38] sm:$0xff]
  %v51 = vld [vmem:[%s2 + $0x40] sm:$0xff]
  %v52 = vld [vmem:[%s2 + $0x48] sm:$0xff]
  %v53 = vld [vmem:[%s2 + $0x50] sm:$0xff]
  %v54 = vld [vmem:[%s2 + $0x58] sm:$0xff]
  %v55 = vld [vmem:[%s2 + $0x60] sm:$0xff]
  %v56 = vld [vmem:[%s2 + $0x68] sm:$0xff]
  %v57 = vld [vmem:[%s2 + $0x70] sm:$0xff]
  %v58 = vld [vmem:[%s2 + $0x78] sm:$0xff]
  %60 = vset.pattern.permute.xlu0 0
  %61 = vperm.xlu0 %60, %v43
  %v62 = vpop.permute.xlu0 %61
  %65 = vset.pattern.permute.xlu0 0
  %66 = vperm.xlu0 %65, %v44
  %v67 = vpop.permute.xlu0 %66
  %70 = vset.pattern.permute.xlu0 0
  %71 = vperm.xlu0 %70, %v45
  %v72 = vpop.permute.xlu0 %71
  %75 = vset.pattern.permute.xlu0 0
  %76 = vperm.xlu0 %75, %v46
  %v77 = vpop.permute.xlu0 %76
  %80 = vset.pattern.permute.xlu0 0
  %81 = vperm.xlu0 %80, %v47
  %v82 = vpop.permute.xlu0 %81
  %85 = vset.pattern.permute.xlu0 0
  %86 = vperm.xlu0 %85, %v48
  %v87 = vpop.permute.xlu0 %86
  %90 = vset.pattern.permute.xlu0 0
  %91 = vperm.xlu0 %90, %v49
  %v92 = vpop.permute.xlu0 %91
  %95 = vset.pattern.permute.xlu0 0
  %96 = vperm.xlu0 %95, %v50
  %v97 = vpop.permute.xlu0 %96
  %100 = vset.pattern.permute.xlu0 0
  %101 = vperm.xlu0 %100, %v51
  %v102 = vpop.permute.xlu0 %101
  %105 = vset.pattern.permute.xlu0 0
  %106 = vperm.xlu0 %105, %v52
  %v107 = vpop.permute.xlu0 %106
  %110 = vset.pattern.permute.xlu0 0
  %111 = vperm.xlu0 %110, %v53
  %v112 = vpop.permute.xlu0 %111
  %115 = vset.pattern.permute.xlu0 0
  %116 = vperm.xlu0 %115, %v54
  %v117 = vpop.permute.xlu0 %116
  %120 = vset.pattern.permute.xlu0 0
  %121 = vperm.xlu0 %120, %v55
  %v122 = vpop.permute.xlu0 %121
  %125 = vset.pattern.permute.xlu0 0
  %126 = vperm.xlu0 %125, %v56
  %v127 = vpop.permute.xlu0 %126
  %130 = vset.pattern.permute.xlu0 0
  %131 = vperm.xlu0 %130, %v57
  %v132 = vpop.permute.xlu0 %131
  %135 = vset.pattern.permute.xlu0 0
  %136 = vperm.xlu0 %135, %v58
  %v137 = vpop.permute.xlu0 %136
  %vm139 = vcmask 64512
  %v141 = vsel %vm139, %v27, 0
  %v144 = vsel %vm139, %v28, 0
  %v147 = vsel %vm139, %v29, 0
  %v150 = vsel %vm139, %v30, 0
  %v153 = vsel %vm139, %v31, 0
  %v156 = vsel %vm139, %v32, 0
  %v159 = vsel %vm139, %v33, 0
  %v162 = vsel %vm139, %v34, 0
  %v165 = vsel %vm139, %v35, 0
  %v168 = vsel %vm139, %v36, 0
  %v171 = vsel %vm139, %v37, 0
  %v174 = vsel %vm139, %v38, 0
  %v177 = vsel %vm139, %v39, 0
  %v180 = vsel %vm139, %v40, 0
  %v183 = vsel %vm139, %v41, 0
  %v186 = vsel %vm139, %v42, 0
  %188 = vmatpush.msra.mxu0 0.0
  %189 = vmatpush.msra.mxu0 0.0
  %190 = vmatpush.msra.mxu0 0.0
  %191 = vmatpush.msra.mxu0 0.0
  %192 = vmatpush.msra.mxu0 0.0
  %193 = vmatpush.msra.mxu0 0.0
  %194 = vmatpush.msra.mxu0 0.0
  %195 = vmatpush.msra.mxu0 0.0
  %196 = vmatpush.msra.mxu0 0.0
  %197 = vmatpush.msra.mxu0 0.0
  %198 = vmatpush.msra.mxu0 0.0
  %199 = vmatpush.msra.mxu0 0.0
  %200 = vmatpush.msra.mxu0 0.0
  %201 = vmatpush.msra.mxu0 0.0
  %202 = vmatpush.msra.mxu0 0.0
  %203 = vmatpush.msra.mxu0 %v26
  %204 = vmatmul.f32.gmra.mxu0 %v141
  %v205 = vpop.f32.mrf.mxu0
  %v206 = vadd.f32 %v62, %v205
  %207 = vmatmul.f32.gmra.mxu0 %v144
  %v208 = vpop.f32.mrf.mxu0
  %v209 = vadd.f32 %v67, %v208
  %210 = vmatmul.f32.gmra.mxu0 %v147
  %v211 = vpop.f32.mrf.mxu0
  %v212 = vadd.f32 %v72, %v211
  %213 = vmatmul.f32.gmra.mxu0 %v150
  %v214 = vpop.f32.mrf.mxu0
  %v215 = vadd.f32 %v77, %v214
  %216 = vmatmul.f32.gmra.mxu0 %v153
  %v217 = vpop.f32.mrf.mxu0
  %v218 = vadd.f32 %v82, %v217
  %219 = vmatmul.f32.gmra.mxu0 %v156
  %v220 = vpop.f32.mrf.mxu0
  %v221 = vadd.f32 %v87, %v220
  %222 = vmatmul.f32.gmra.mxu0 %v159
  %v223 = vpop.f32.mrf.mxu0
  %v224 = vadd.f32 %v92, %v223
  %225 = vmatmul.f32.gmra.mxu0 %v162
  %v226 = vpop.f32.mrf.mxu0
  %v227 = vadd.f32 %v97, %v226
  %228 = vmatmul.f32.gmra.mxu0 %v165
  %v229 = vpop.f32.mrf.mxu0
  %v230 = vadd.f32 %v102, %v229
  %231 = vmatmul.f32.gmra.mxu0 %v168
  %v232 = vpop.f32.mrf.mxu0
  %v233 = vadd.f32 %v107, %v232
  %234 = vmatmul.f32.gmra.mxu0 %v171
  %v235 = vpop.f32.mrf.mxu0
  %v236 = vadd.f32 %v112, %v235
  %237 = vmatmul.f32.gmra.mxu0 %v174
  %v238 = vpop.f32.mrf.mxu0
  %v239 = vadd.f32 %v117, %v238
  %240 = vmatmul.f32.gmra.mxu0 %v177
  %v241 = vpop.f32.mrf.mxu0
  %v242 = vadd.f32 %v122, %v241
  %243 = vmatmul.f32.gmra.mxu0 %v180
  %v244 = vpop.f32.mrf.mxu0
  %v245 = vadd.f32 %v127, %v244
  %246 = vmatmul.f32.gmra.mxu0 %v183
  %v247 = vpop.f32.mrf.mxu0
  %v248 = vadd.f32 %v132, %v247
  %249 = vmatmul.f32.gmra.mxu0 %v186
  %v250 = vpop.f32.mrf.mxu0
  %v251 = vadd.f32 %v137, %v250
  %252 = vdwg.mxu0
  %v253 = vmax.f32 %v206, 0.0
  %v254 = vmax.f32 %v209, 0.0
  %v255 = vmax.f32 %v212, 0.0
  %v256 = vmax.f32 %v215, 0.0
  %v257 = vmax.f32 %v218, 0.0
  %v258 = vmax.f32 %v221, 0.0
  %v259 = vmax.f32 %v224, 0.0
  %v260 = vmax.f32 %v227, 0.0
  %v261 = vmax.f32 %v230, 0.0
  %v262 = vmax.f32 %v233, 0.0
  %v263 = vmax.f32 %v236, 0.0
  %v264 = vmax.f32 %v239, 0.0
  %v265 = vmax.f32 %v242, 0.0
  %v266 = vmax.f32 %v245, 0.0
  %v267 = vmax.f32 %v248, 0.0
  %v268 = vmax.f32 %v251, 0.0
  %v269 = vld [vmem:[%s3] sm:$0xff]
  %v270 = vld [vmem:[%s3 + $0x8] sm:$0xff]
  %v271 = vld [vmem:[%s3 + $0x10] sm:$0xff]
  %v272 = vld [vmem:[%s3 + $0x18] sm:$0xff]
  %v273 = vld [vmem:[%s3 + $0x20] sm:$0xff]
  %v274 = vld [vmem:[%s3 + $0x28] sm:$0xff]
  %v275 = vld [vmem:[%s3 + $0x30] sm:$0xff]
  %v276 = vld [vmem:[%s3 + $0x38] sm:$0xff]
  %v277 = vld [vmem:[%s3 + $0x40] sm:$0xff]
  %v278 = vld [vmem:[%s3 + $0x48] sm:$0xff]
  %v279 = vld [vmem:[%s3 + $0x50] sm:$0xff]
  %v280 = vld [vmem:[%s3 + $0x58] sm:$0xff]
  %v281 = vld [vmem:[%s3 + $0x60] sm:$0xff]
  %v282 = vld [vmem:[%s3 + $0x68] sm:$0xff]
  %v283 = vld [vmem:[%s3 + $0x70] sm:$0xff]
  %v284 = vld [vmem:[%s3 + $0x78] sm:$0xff]
  %v285 = vld [vmem:[%s4] sm:$0xff]
  %v286 = vld [vmem:[%s4 + $0x8] sm:$0xff]
  %v287 = vld [vmem:[%s4 + $0x10] sm:$0xff]
  %v288 = vld [vmem:[%s4 + $0x18] sm:$0xff]
  %v289 = vld [vmem:[%s4 + $0x20] sm:$0xff]
  %v290 = vld [vmem:[%s4 + $0x28] sm:$0xff]
  %v291 = vld [vmem:[%s4 + $0x30] sm:$0xff]
  %v292 = vld [vmem:[%s4 + $0x38] sm:$0xff]
  %v293 = vld [vmem:[%s4 + $0x40] sm:$0xff]
  %v294 = vld [vmem:[%s4 + $0x48] sm:$0xff]
  %v295 = vld [vmem:[%s4 + $0x50] sm:$0xff]
  %v296 = vld [vmem:[%s4 + $0x58] sm:$0xff]
  %v297 = vld [vmem:[%s4 + $0x60] sm:$0xff]
  %v298 = vld [vmem:[%s4 + $0x68] sm:$0xff]
  %v299 = vld [vmem:[%s4 + $0x70] sm:$0xff]
  %v300 = vld [vmem:[%s4 + $0x78] sm:$0xff]
  %302 = vset.pattern.permute.xlu0 0
  %303 = vperm.xlu0 %302, %v285
  %v304 = vpop.permute.xlu0 %303
  %307 = vset.pattern.permute.xlu0 0
  %308 = vperm.xlu0 %307, %v286
  %v309 = vpop.permute.xlu0 %308
  %312 = vset.pattern.permute.xlu0 0
  %313 = vperm.xlu0 %312, %v287
  %v314 = vpop.permute.xlu0 %313
  %317 = vset.pattern.permute.xlu0 0
  %318 = vperm.xlu0 %317, %v288
  %v319 = vpop.permute.xlu0 %318
  %322 = vset.pattern.permute.xlu0 0
  %323 = vperm.xlu0 %322, %v289
  %v324 = vpop.permute.xlu0 %323
  %327 = vset.pattern.permute.xlu0 0
  %328 = vperm.xlu0 %327, %v290
  %v329 = vpop.permute.xlu0 %328
  %332 = vset.pattern.permute.xlu0 0
  %333 = vperm.xlu0 %332, %v291
  %v334 = vpop.permute.xlu0 %333
  %337 = vset.pattern.permute.xlu0 0
  %338 = vperm.xlu0 %337, %v292
  %v339 = vpop.permute.xlu0 %338
  %342 = vset.pattern.permute.xlu0 0
  %343 = vperm.xlu0 %342, %v293
  %v344 = vpop.permute.xlu0 %343
  %347 = vset.pattern.permute.xlu0 0
  %348 = vperm.xlu0 %347, %v294
  %v349 = vpop.permute.xlu0 %348
  %352 = vset.pattern.permute.xlu0 0
  %353 = vperm.xlu0 %352, %v295
  %v354 = vpop.permute.xlu0 %353
  %357 = vset.pattern.permute.xlu0 0
  %358 = vperm.xlu0 %357, %v296
  %v359 = vpop.permute.xlu0 %358
  %362 = vset.pattern.permute.xlu0 0
  %363 = vperm.xlu0 %362, %v297
  %v364 = vpop.permute.xlu0 %363
  %367 = vset.pattern.permute.xlu0 0
  %368 = vperm.xlu0 %367, %v298
  %v369 = vpop.permute.xlu0 %368
  %372 = vset.pattern.permute.xlu0 0
  %373 = vperm.xlu0 %372, %v299
  %v374 = vpop.permute.xlu0 %373
  %377 = vset.pattern.permute.xlu0 0
  %378 = vperm.xlu0 %377, %v300
  %v379 = vpop.permute.xlu0 %378
  %381 = vmatpush.msra.mxu0 %v268
  %382 = vmatpush.msra.mxu0 %v267
  %383 = vmatpush.msra.mxu0 %v266
  %384 = vmatpush.msra.mxu0 %v265
  %385 = vmatpush.msra.mxu0 %v264
  %386 = vmatpush.msra.mxu0 %v263
  %387 = vmatpush.msra.mxu0 %v262
  %388 = vmatpush.msra.mxu0 %v261
  %389 = vmatpush.msra.mxu0 %v260
  %390 = vmatpush.msra.mxu0 %v259
  %391 = vmatpush.msra.mxu0 %v258
  %392 = vmatpush.msra.mxu0 %v257
  %393 = vmatpush.msra.mxu0 %v256
  %394 = vmatpush.msra.mxu0 %v255
  %395 = vmatpush.msra.mxu0 %v254
  %396 = vmatpush.msra.mxu0 %v253
  %397 = vmatmul.f32.gmra.mxu0 %v269
  %v398 = vpop.f32.mrf.mxu0
  %v399 = vadd.f32 %v304, %v398
  %400 = vmatmul.f32.gmra.mxu0 %v270
  %v401 = vpop.f32.mrf.mxu0
  %v402 = vadd.f32 %v309, %v401
  %403 = vmatmul.f32.gmra.mxu0 %v271
  %v404 = vpop.f32.mrf.mxu0
  %v405 = vadd.f32 %v314, %v404
  %406 = vmatmul.f32.gmra.mxu0 %v272
  %v407 = vpop.f32.mrf.mxu0
  %v408 = vadd.f32 %v319, %v407
  %409 = vmatmul.f32.gmra.mxu0 %v273
  %v410 = vpop.f32.mrf.mxu0
  %v411 = vadd.f32 %v324, %v410
  %412 = vmatmul.f32.gmra.mxu0 %v274
  %v413 = vpop.f32.mrf.mxu0
  %v414 = vadd.f32 %v329, %v413
  %415 = vmatmul.f32.gmra.mxu0 %v275
  %v416 = vpop.f32.mrf.mxu0
  %v417 = vadd.f32 %v334, %v416
  %418 = vmatmul.f32.gmra.mxu0 %v276
  %v419 = vpop.f32.mrf.mxu0
  %v420 = vadd.f32 %v339, %v419
  %421 = vmatmul.f32.gmra.mxu0 %v277
  %v422 = vpop.f32.mrf.mxu0
  %v423 = vadd.f32 %v344, %v422
  %424 = vmatmul.f32.gmra.mxu0 %v278
  %v425 = vpop.f32.mrf.mxu0
  %v426 = vadd.f32 %v349, %v425
  %427 = vmatmul.f32.gmra.mxu0 %v279
  %v428 = vpop.f32.mrf.mxu0
  %v429 = vadd.f32 %v354, %v428
  %430 = vmatmul.f32.gmra.mxu0 %v280
  %v431 = vpop.f32.mrf.mxu0
  %v432 = vadd.f32 %v359, %v431
  %433 = vmatmul.f32.gmra.mxu0 %v281
  %v434 = vpop.f32.mrf.mxu0
  %v435 = vadd.f32 %v364, %v434
  %436 = vmatmul.f32.gmra.mxu0 %v282
  %v437 = vpop.f32.mrf.mxu0
  %v438 = vadd.f32 %v369, %v437
  %439 = vmatmul.f32.gmra.mxu0 %v283
  %v440 = vpop.f32.mrf.mxu0
  %v441 = vadd.f32 %v374, %v440
  %442 = vmatmul.f32.gmra.mxu0 %v284
  %v443 = vpop.f32.mrf.mxu0
  %v444 = vadd.f32 %v379, %v443
  %445 = vdwg.mxu0
  %v446 = vmax.f32 %v399, 0.0
  %v447 = vmax.f32 %v402, 0.0
  %v448 = vmax.f32 %v405, 0.0
  %v449 = vmax.f32 %v408, 0.0
  %v450 = vmax.f32 %v411, 0.0
  %v451 = vmax.f32 %v414, 0.0
  %v452 = vmax.f32 %v417, 0.0
  %v453 = vmax.f32 %v420, 0.0
  %v454 = vmax.f32 %v423, 0.0
  %v455 = vmax.f32 %v426, 0.0
  %v456 = vmax.f32 %v429, 0.0
  %v457 = vmax.f32 %v432, 0.0
  %v458 = vmax.f32 %v435, 0.0
  %v459 = vmax.f32 %v438, 0.0
  %v460 = vmax.f32 %v441, 0.0
  %v461 = vmax.f32 %v444, 0.0
  %v462 = vld [vmem:[%s5] sm:$0xff]
  %v463 = vld [vmem:[%s6] sm:$0xff]
  %465 = vset.pattern.permute.xlu0 0
  %466 = vperm.xlu0 %465, %v463
  %v467 = vpop.permute.xlu0 %466
  %469 = vmatpush.msra.mxu0 %v461
  %470 = vmatpush.msra.mxu0 %v460
  %471 = vmatpush.msra.mxu0 %v459
  %472 = vmatpush.msra.mxu0 %v458
  %473 = vmatpush.msra.mxu0 %v457
  %474 = vmatpush.msra.mxu0 %v456
  %475 = vmatpush.msra.mxu0 %v455
  %476 = vmatpush.msra.mxu0 %v454
  %477 = vmatpush.msra.mxu0 %v453
  %478 = vmatpush.msra.mxu0 %v452
  %479 = vmatpush.msra.mxu0 %v451
  %480 = vmatpush.msra.mxu0 %v450
  %481 = vmatpush.msra.mxu0 %v449
  %482 = vmatpush.msra.mxu0 %v448
  %483 = vmatpush.msra.mxu0 %v447
  %484 = vmatpush.msra.mxu0 %v446
  %485 = vmatmul.f32.gmra.mxu0 %v462
  %v486 = vpop.f32.mrf.mxu0
  %v487 = vadd.f32 %v467, %v486
  %488 = vdwg.mxu0
  %489 = vst [vmem:[%s7] sm:$0xff] %v487
  // Predicated region
  $region30: #{_forward_impl.1} parent=0 // pred_check
    _
  $region31: #{_forward_impl.1} parent=0 // pred_check_branch
    %491 = sbr.rel (0) target = $region33
  $region32: #{_forward_impl.1} parent=0 // pred_region
    _
  $region33: #{_forward_impl.1} parent=0 // pred_fallthru
    _
  // Predicated region
  $region34: #{_forward_impl.1} parent=0 // pred_check
    _
  $region35: #{_forward_impl.1} parent=0 // pred_check_branch
    %493 = sbr.rel (0) target = $region37
  $region36: #{_forward_impl.1} parent=0 // pred_region
    _
  $region37: #{_forward_impl.1} parent=0 // pred_fallthru
    _

</llo_original>
